<compile_context>
chip_gen: v5e
topology: v5e:2x2
jax: 0.10.0
libtpu: 0.0.40
codegen_flags: <defaults>
</compile_context>

<pallas_src>
import functools

import jax
import jax.numpy as jnp
from jax.experimental import pallas as pl
from jax.experimental.pallas import tpu as pltpu


def _dae_kernel(x_ref, w1_ref, b1_ref, wh_ref, bh_ref, wm_ref, bm_ref,
                o_ref, acc_ref, *, inv_n):
    # x_ref:  (1, TN, C)   one row-tile of one batch element
    # w1_ref: (C, 256)     fc1 weight, pre-transposed;   b1_ref: (1, 256)
    # wh_ref: (256, 128)   fch weight, pre-transposed;   bh_ref: (1, 128)
    # wm_ref: (1, 128)     fc2_mean weight row
    # bm_ref: (1,)         fc2_mean bias (SMEM scalar)
    # o_ref:  (1, 1, 128)  lane-dense per-batch output
    # acc_ref:(1, 128)     VMEM running per-lane partial sum for this batch
    j = pl.program_id(1)

    @pl.when(j == 0)
    def _init():
        acc_ref[...] = jnp.zeros_like(acc_ref)

    x = x_ref[0]                                                  # (TN, C)
    h0 = jnp.maximum(
        jnp.dot(x, w1_ref[...], preferred_element_type=jnp.float32)
        + b1_ref[...], 0.0)                                       # (TN, 256)
    h1 = jnp.maximum(
        jnp.dot(h0, wh_ref[...], preferred_element_type=jnp.float32)
        + bh_ref[...], 0.0)                                       # (TN, 128)

    # fc2_mean without a width-1 MXU matmul: broadcast-multiply (VPU) then
    # reduce over the row (sublane) axis; lanes are reduced once at finalize.
    acc_ref[...] += jnp.sum(h1 * wm_ref[...], axis=0, keepdims=True)  # (1,128)

    @pl.when(j == pl.num_programs(1) - 1)
    def _finalize():
        z = jnp.sum(acc_ref[...]) * inv_n + bm_ref[0]   # fold bias after mean
        o_ref[...] = jnp.full(o_ref.shape, z, dtype=o_ref.dtype)


def _pick_row_tile(n, cap=1024):
    """Largest divisor of n <= cap that keeps the sublane dim a multiple of 8
    (or the full extent).  cap=1024 keeps double-buffered x well under the
    default scoped-VMEM limit on v5e/v6e/v7x; raise it (with
    CompilerParams(vmem_limit_bytes=...)) on v5e/v6e if desired."""
    if n <= cap:
        return n
    for cand in range(cap, 0, -1):
        if n % cand == 0 and cand % 8 == 0:
            return cand
    return n


def dae_forward(x, params, *, row_tile=None):
    """x: (B, N, C) float32. params: (w1, b1, wh, bh, wm, bm, wv, bv) in
    PyTorch (out, in) layout. Returns z: (B,) float32 (eval-mode forward)."""
    w1, b1, wh, bh, wm, bm, _wv, _bv = params   # logvar head unused in eval
    B, N, C = x.shape
    tn = row_tile or _pick_row_tile(N)
    assert N % tn == 0, "row tile must divide N"
    grid = (B, N // tn)

    out = pl.pallas_call(
        functools.partial(_dae_kernel, inv_n=1.0 / N),
        out_shape=jax.ShapeDtypeStruct((B, 1, 128), jnp.float32),
        grid=grid,
        in_specs=[
            pl.BlockSpec((1, tn, C), lambda b, j: (b, j, 0)),      # x tile
            pl.BlockSpec((C, w1.shape[0]), lambda b, j: (0, 0)),   # W1^T
            pl.BlockSpec((1, w1.shape[0]), lambda b, j: (0, 0)),   # b1
            pl.BlockSpec((w1.shape[0], wh.shape[0]),
                         lambda b, j: (0, 0)),                     # Wh^T
            pl.BlockSpec((1, wh.shape[0]), lambda b, j: (0, 0)),   # bh
            pl.BlockSpec((1, wh.shape[0]), lambda b, j: (0, 0)),   # Wm row
            pl.BlockSpec(memory_space=pltpu.MemorySpace.SMEM),     # bm scalar
        ],
        out_specs=pl.BlockSpec((1, 1, 128), lambda b, j: (b, 0, 0)),
        scratch_shapes=[pltpu.VMEM((1, 128), jnp.float32)],
        compiler_params=pltpu.CompilerParams(
            dimension_semantics=("parallel", "arbitrary")),
    )(
        x,
        w1.T,                        # (C, 256)
        b1.reshape(1, -1),           # (1, 256)
        wh.T,                        # (256, 128)
        bh.reshape(1, -1),           # (1, 128)
        wm.reshape(1, -1),           # (1, 128)
        bm.reshape(-1).astype(jnp.float32),   # (1,)
    )
    return out[:, 0, 0]


def init_params(key, in_channels=512, out_channels=1):
    """Deterministic init mimicking nn.Linear's uniform(-1/sqrt(fan_in), ...)."""
    ks = jax.random.split(key, 8)

    def linear(kw, kb, fan_out, fan_in):
        lim = 1.0 / (fan_in ** 0.5)
        w = jax.random.uniform(kw, (fan_out, fan_in), jnp.float32, -lim, lim)
        b = jax.random.uniform(kb, (fan_out,), jnp.float32, -lim, lim)
        return w, b

    w1, b1 = linear(ks[0], ks[1], 256, in_channels)       # fc1
    wh, bh = linear(ks[2], ks[3], 128, 256)                # fch
    wm, bm = linear(ks[4], ks[5], out_channels, 128)       # fc2_mean
    wv, bv = linear(ks[6], ks[7], out_channels, 128)       # fc2_logvar
    return w1, b1, wh, bh, wm, bm, wv, bv


def dae_forward_ref(x, params):
    """Pure-JAX reference mirroring the PyTorch module (eval mode)."""
    w1, b1, wh, bh, wm, bm, _wv, _bv = params
    B, N, C = x.shape
    h = x.reshape(B * N, C)
    h0 = jax.nn.relu(h @ w1.T + b1)
    h1 = jax.nn.relu(h0 @ wh.T + bh)
    mu = h1 @ wm.T + bm                 # (B*N, 1); eval reparametrize: z = mu
    return mu.reshape(B, N).mean(axis=1)


if __name__ == "__main__":
    key = jax.random.PRNGKey(0)
    kx, kp = jax.random.split(key)

    B, N, C_IN = 2, 8, 512
    x = jax.random.normal(kx, (B, N, C_IN), dtype=jnp.float32)
    params = init_params(kp, in_channels=C_IN)

    z = dae_forward(x, params)
    z = jax.block_until_ready(z)

    z_ref = dae_forward_ref(x, params)
    assert z.shape == (B,)
    assert jnp.allclose(z, z_ref, atol=1e-4, rtol=1e-4), (z, z_ref)

    print("KERNEL_OK")
</pallas_src>

<mosaic_0001>
module attributes {stable_mosaic.version = 11 : i64} {
  func.func @_dae_kernel(%arg0: i32, %arg1: i32, %arg2: memref<1x8x512xf32, #tpu.memory_space<vmem>>, %arg3: memref<512x256xf32, #tpu.memory_space<vmem>>, %arg4: memref<1x256xf32, #tpu.memory_space<vmem>>, %arg5: memref<256x128xf32, #tpu.memory_space<vmem>>, %arg6: memref<1x128xf32, #tpu.memory_space<vmem>>, %arg7: memref<1x128xf32, #tpu.memory_space<vmem>>, %arg8: memref<1xf32, #tpu.memory_space<smem>>, %arg9: memref<1x1x128xf32, #tpu.memory_space<vmem>>, %arg10: memref<1x128xf32, #tpu.memory_space<vmem>>) attributes {dimension_semantics = [#tpu.dimension_semantics<parallel>, #tpu.dimension_semantics<arbitrary>], iteration_bounds = array<i64: 2, 1>, scalar_prefetch = 0 : i64, scratch_operands = 1 : i64, tpu.core_type = #tpu.core_type<tc>, window_params = [{transform_indices = @transform_0, window_bounds = array<i64: 1, 8, 512>}, {pipeline_mode = #tpu.pipeline_mode<synchronous>, transform_indices = @transform_1, window_bounds = array<i64: 512, 256>}, {pipeline_mode = #tpu.pipeline_mode<synchronous>, transform_indices = @transform_2, window_bounds = array<i64: 1, 256>}, {pipeline_mode = #tpu.pipeline_mode<synchronous>, transform_indices = @transform_3, window_bounds = array<i64: 256, 128>}, {pipeline_mode = #tpu.pipeline_mode<synchronous>, transform_indices = @transform_4, window_bounds = array<i64: 1, 128>}, {pipeline_mode = #tpu.pipeline_mode<synchronous>, transform_indices = @transform_5, window_bounds = array<i64: 1, 128>}, {transform_indices = @transform_6, window_bounds = array<i64: 1>}, {transform_indices = @transform_7, window_bounds = array<i64: 1, 1, 128>}]} {
    %c0_i32 = arith.constant 0 : i32
    %0 = arith.cmpi eq, %arg1, %c0_i32 : i32
    %1 = arith.extui %0 : i1 to i32
    %c0_i32_0 = arith.constant 0 : i32
    %2 = arith.cmpi ne, %1, %c0_i32_0 : i32
    scf.if %2 {
      %cst_23 = arith.constant 0.000000e+00 : f32
      %30 = vector.broadcast %cst_23 : f32 to vector<1x128xf32>
      %c0_24 = arith.constant 0 : index
      %c0_25 = arith.constant 0 : index
      %31 = vector.load %arg10[%c0_24, %c0_25] : memref<1x128xf32, #tpu.memory_space<vmem>>, vector<1x128xf32>
      tpu.vector_store %arg10[%c0_24, %c0_25], %30 {strides = array<i32>} : memref<1x128xf32, #tpu.memory_space<vmem>>, vector<1x128xf32>,
    } else {
    }
    %c0 = arith.constant 0 : index
    %c0_1 = arith.constant 0 : index
    %c0_2 = arith.constant 0 : index
    %3 = vector.load %arg2[%c0, %c0_1, %c0_2] : memref<1x8x512xf32, #tpu.memory_space<vmem>>, vector<1x8x512xf32>
    %4 = vector.shape_cast %3 : vector<1x8x512xf32> to vector<8x512xf32>
    %c0_3 = arith.constant 0 : index
    %c0_4 = arith.constant 0 : index
    %5 = vector.load %arg3[%c0_3, %c0_4] : memref<512x256xf32, #tpu.memory_space<vmem>>, vector<512x256xf32>
    %cst = arith.constant dense<0.000000e+00> : vector<8x256xf32>
    %6 = tpu.matmul %4, %5, %cst {dimension_numbers = #tpu.dot_dimension_numbers<[1], [0], [0], [1], [0, 0, 1, 1], [], []>} : vector<8x512xf32>, vector<512x256xf32>, vector<8x256xf32> -> vector<8x256xf32>
    %c0_5 = arith.constant 0 : index
    %c0_6 = arith.constant 0 : index
    %7 = vector.load %arg4[%c0_5, %c0_6] : memref<1x256xf32, #tpu.memory_space<vmem>>, vector<1x256xf32>
    %8 = vector.broadcast %7 : vector<1x256xf32> to vector<8x256xf32>
    %9 = arith.addf %6, %8 : vector<8x256xf32>
    %cst_7 = arith.constant 0.000000e+00 : f32
    %10 = vector.broadcast %cst_7 : f32 to vector<8x256xf32>
    %11 = arith.maximumf %9, %10 : vector<8x256xf32>
    %c0_8 = arith.constant 0 : index
    %c0_9 = arith.constant 0 : index
    %12 = vector.load %arg5[%c0_8, %c0_9] : memref<256x128xf32, #tpu.memory_space<vmem>>, vector<256x128xf32>
    %cst_10 = arith.constant dense<0.000000e+00> : vector<8x128xf32>
    %13 = tpu.matmul %11, %12, %cst_10 {dimension_numbers = #tpu.dot_dimension_numbers<[1], [0], [0], [1], [0, 0, 1, 1], [], []>} : vector<8x256xf32>, vector<256x128xf32>, vector<8x128xf32> -> vector<8x128xf32>
    %c0_11 = arith.constant 0 : index
    %c0_12 = arith.constant 0 : index
    %14 = vector.load %arg6[%c0_11, %c0_12] : memref<1x128xf32, #tpu.memory_space<vmem>>, vector<1x128xf32>
    %15 = vector.broadcast %14 : vector<1x128xf32> to vector<8x128xf32>
    %16 = arith.addf %13, %15 : vector<8x128xf32>
    %cst_13 = arith.constant 0.000000e+00 : f32
    %17 = vector.broadcast %cst_13 : f32 to vector<8x128xf32>
    %18 = arith.maximumf %16, %17 : vector<8x128xf32>
    %c0_14 = arith.constant 0 : index
    %c0_15 = arith.constant 0 : index
    %19 = vector.load %arg10[%c0_14, %c0_15] : memref<1x128xf32, #tpu.memory_space<vmem>>, vector<1x128xf32>
    %c0_16 = arith.constant 0 : index
    %c0_17 = arith.constant 0 : index
    %20 = vector.load %arg7[%c0_16, %c0_17] : memref<1x128xf32, #tpu.memory_space<vmem>>, vector<1x128xf32>
    %21 = vector.broadcast %20 : vector<1x128xf32> to vector<8x128xf32>
    %22 = arith.mulf %18, %21 : vector<8x128xf32>
    %cst_18 = arith.constant dense<0.000000e+00> : vector<128xf32>
    %23 = vector.multi_reduction <add>, %22, %cst_18 [0] : vector<8x128xf32> to vector<128xf32>
    %24 = vector.shape_cast %23 : vector<128xf32> to vector<1x128xf32>
    %25 = arith.addf %19, %24 : vector<1x128xf32>
    %c0_19 = arith.constant 0 : index
    %c0_20 = arith.constant 0 : index
    %26 = vector.load %arg10[%c0_19, %c0_20] : memref<1x128xf32, #tpu.memory_space<vmem>>, vector<1x128xf32>
    tpu.vector_store %arg10[%c0_19, %c0_20], %25 {strides = array<i32>} : memref<1x128xf32, #tpu.memory_space<vmem>>, vector<1x128xf32>,
    %c0_i32_21 = arith.constant 0 : i32
    %27 = arith.cmpi eq, %arg1, %c0_i32_21 : i32
    %28 = arith.extui %27 : i1 to i32
    %c0_i32_22 = arith.constant 0 : i32
    %29 = arith.cmpi ne, %28, %c0_i32_22 : i32
    scf.if %29 {
      %c0_23 = arith.constant 0 : index
      %c0_24 = arith.constant 0 : index
      %30 = vector.load %arg10[%c0_23, %c0_24] : memref<1x128xf32, #tpu.memory_space<vmem>>, vector<1x128xf32>
      %31 = vector.shape_cast %30 : vector<1x128xf32> to vector<1x1x128xf32>
      %cst_25 = arith.constant dense<0.000000e+00> : vector<1xf32>
      %32 = vector.multi_reduction <add>, %31, %cst_25 [1, 2] : vector<1x1x128xf32> to vector<1xf32>
      %33 = vector.shape_cast %32 : vector<1xf32> to vector<1x1x1xf32>
      %34 = vector.extract %33[0, 0, 0] : f32 from vector<1x1x1xf32>
      %cst_26 = arith.constant 1.250000e-01 : f32
      %35 = arith.mulf %34, %cst_26 : f32
      %c0_27 = arith.constant 0 : index
      %36 = memref.load %arg8[%c0_27] : memref<1xf32, #tpu.memory_space<smem>>
      %37 = arith.addf %35, %36 : f32
      %38 = vector.broadcast %37 : f32 to vector<1x1x128xf32>
      %c0_28 = arith.constant 0 : index
      %c0_29 = arith.constant 0 : index
      %c0_30 = arith.constant 0 : index
      %39 = vector.load %arg9[%c0_28, %c0_29, %c0_30] : memref<1x1x128xf32, #tpu.memory_space<vmem>>, vector<1x1x128xf32>
      tpu.vector_store %arg9[%c0_28, %c0_29, %c0_30], %38 {strides = array<i32>} : memref<1x1x128xf32, #tpu.memory_space<vmem>>, vector<1x1x128xf32>,
    } else {
    }
    return
  }
  func.func @transform_0(%arg0: i32, %arg1: i32) -> (i32, i32, i32) {
    %c0_i32 = arith.constant 0 : i32
    %c0_i32_0 = arith.constant 0 : i32
    return %arg0, %arg1, %c0_i32 : i32, i32, i32
  }
  func.func @transform_1(%arg0: i32, %arg1: i32) -> (i32, i32) {
    %c0_i32 = arith.constant 0 : i32
    %c0_i32_0 = arith.constant 0 : i32
    %c0_i32_1 = arith.constant 0 : i32
    return %c0_i32, %c0_i32_0 : i32, i32
  }
  func.func @transform_2(%arg0: i32, %arg1: i32) -> (i32, i32) {
    %c0_i32 = arith.constant 0 : i32
    %c0_i32_0 = arith.constant 0 : i32
    %c0_i32_1 = arith.constant 0 : i32
    return %c0_i32, %c0_i32_0 : i32, i32
  }
  func.func @transform_3(%arg0: i32, %arg1: i32) -> (i32, i32) {
    %c0_i32 = arith.constant 0 : i32
    %c0_i32_0 = arith.constant 0 : i32
    %c0_i32_1 = arith.constant 0 : i32
    return %c0_i32, %c0_i32_0 : i32, i32
  }
  func.func @transform_4(%arg0: i32, %arg1: i32) -> (i32, i32) {
    %c0_i32 = arith.constant 0 : i32
    %c0_i32_0 = arith.constant 0 : i32
    %c0_i32_1 = arith.constant 0 : i32
    return %c0_i32, %c0_i32_0 : i32, i32
  }
  func.func @transform_5(%arg0: i32, %arg1: i32) -> (i32, i32) {
    %c0_i32 = arith.constant 0 : i32
    %c0_i32_0 = arith.constant 0 : i32
    %c0_i32_1 = arith.constant 0 : i32
    return %c0_i32, %c0_i32_0 : i32, i32
  }
  func.func @transform_6(%arg0: i32, %arg1: i32) -> i32 {
    %c0_i32 = arith.constant 0 : i32
    %c0_i32_0 = arith.constant 0 : i32
    return %c0_i32 : i32
  }
  func.func @transform_7(%arg0: i32, %arg1: i32) -> (i32, i32, i32) {
    %c0_i32 = arith.constant 0 : i32
    %c0_i32_0 = arith.constant 0 : i32
    %c0_i32_1 = arith.constant 0 : i32
    return %arg0, %c0_i32, %c0_i32_0 : i32, i32, i32
  }
}

</mosaic_0001>

<llo_original>
// kernel: tpu_custom_call.1
$region0: #{tpu_custom_call.1}
  #allocation0 [shape = 'u32[]', space=smem, size = 0x4, offset = 0x4, fixed_abs, tag = 'smem constant byte address 0x4 - core index']
  #allocation1 [shape = 'u32[72,128]{1,0:T(1,128)}', space=vmem, size = 0x9000, scoped, tag = 'internal scratch']
  #allocation2 [shape = 'f32[1,128]{1,0:T(1,128)}', space=vmem, size = 0x200, scoped, tag = 'scratch operand']
  #allocation3 [shape = 'f32[1]{0:T(128)S(6)}', space=smem, size = 0x200, scoped, tag = 'scoped memory for tpu_custom_call.1']
  %s0 = inlined_call_operand.hbm [shape: f32[2,8,512], index: 0, kind: input, shape index: {}]
  %s1 = inlined_call_operand.hbm [shape: f32[512,256], index: 1, kind: input, shape index: {}]
  %s2 = inlined_call_operand.vmem [shape: f32[1,256], index: 2, kind: input, shape index: {}]
  %s3 = inlined_call_operand.hbm [shape: f32[256,128], index: 3, kind: input, shape index: {}]
  %s4 = inlined_call_operand.vmem [shape: f32[1,128], index: 4, kind: input, shape index: {}]
  %s5 = inlined_call_operand.vmem [shape: f32[1,128], index: 5, kind: input, shape index: {}]
  %s6 = inlined_call_operand.<no memory space> [shape: f32[1], index: 6, kind: input, shape index: {}]
  %s7 = inlined_call_operand.hbm [shape: f32[2,1,128], index: 7, kind: output, shape index: {}]
  %s8 = sld [smem:[#allocation0]]
  $region81: #{tpu_custom_call.1} parent=0
    _
  %s10 = ssub.s32 1, %s8
  %s11 = scalar_select 0, %s10, %s8
  %12 = sst [smem:[#allocation3]] %s6
  $region1: #{tpu_custom_call.1} parent=0
    #allocation4 [shape = 'u8[32768]{0}', space=vmem, size = 0x8000, scoped, tag = 'input window, operand 0']
    #allocation5 [shape = 's32[2]{0}', space=sflag, size = 0x8, scoped, tag = 'scoped memory for tpu_custom_call.1']
    #allocation6 [shape = 's32[2]{0}', space=sflag, size = 0x8, scoped, tag = 'scoped memory for tpu_custom_call.1']
    #allocation7 [shape = 'u8[524288]{0}', space=vmem, size = 0x80000, scoped, tag = 'input window, operand 1, single buffered']
    #allocation8 [shape = 's32[1]{0}', space=sflag, size = 0x4, scoped, tag = 'scoped memory for tpu_custom_call.1']
    #allocation9 [shape = 'u8[131072]{0}', space=vmem, size = 0x20000, scoped, tag = 'input window, operand 3, single buffered']
    #allocation10 [shape = 'u8[1024]{0}', space=vmem, size = 0x400, scoped, tag = 'output window, operand 0']
    %13 = vsyncpa [#allocation5], 0
    %s14 = scalar_lea.sflag [#allocation5], 1
    %15 = vsyncpa %s14, 0
    %16 = vsyncpa [#allocation8], 0
    %17 = vsyncpa [#allocation6], 0
    %s18 = scalar_lea.sflag [#allocation6], 1
    %19 = vsyncpa %s18, 0
    loop: start=0, step=1, limit=4
    $region2: #{tpu_custom_call.1} parent=1 // loop_pre_header
      _
    $region3: #{tpu_custom_call.1} parent=1 // loop_header
      %s21 = sphi 0, %s25
      %p22 = scmp.ge.s32.totalorder %s21, 4
      %s28 = sphi 0, %s40
      %s29 = sphi 0, %s36
      %s30 = sphi 0, %s28
      %s31 = sphi 0, %s29
      %s32 = sphi 0, %s30
      %s33 = sphi 0, %s31
      %s45 = sphi 0, %s47
      %s48 = sphi 0, %s45
      %s49 = sphi 0, %s48
      %s65 = sphi 0, %s49
      %s69 = sphi 0, %s69
      %s71 = sphi 0, %s69
      %s72 = sphi 0, %s71
      %s86 = sphi 0, %s72
      %s90 = sphi 0, %s90
      %s92 = sphi 0, %s90
      %s93 = sphi 0, %s92
      %s107 = sphi 0, %s93
      %s111 = sphi 0, %s111
      %s113 = sphi 0, %s111
      %s114 = sphi 0, %s113
      %s128 = sphi 0, %s114
      %s132 = sphi 0, %s132
      %s134 = sphi 0, %s132
      %s135 = sphi 0, %s134
      %s149 = sphi 0, %s135
      %s153 = sphi 0, %s153
      %s155 = sphi 0, %s153
      %s156 = sphi 0, %s155
      %s170 = sphi 0, %s156
      %s174 = sphi 0, %s174
      %s176 = sphi 0, %s174
      %s177 = sphi 0, %s176
      %s191 = sphi 0, %s177
      %s197 = sphi 0, %s199
      %s200 = sphi 0, %s197
      %s201 = sphi 0, %s200
      %s217 = sphi 0, %s201
    $region4: #{tpu_custom_call.1} parent=1 // loop_header_branch
      %24 = sbr.rel (%p22) target = $region8
    $region5: #{tpu_custom_call.1} parent=1 // loop_body
      %s26 = ssub.s32 %s21, 1
      %s27 = ssub.s32 %s21, 2
      %s34 = sadd.s32 1, %s29
      %p35 = scmp.ge.s32.totalorder %s34, 1
      %s36 = scalar_select %p35, 0, %s34
      %s37 = sadd.s32 1, %s28
      %s38 = scalar_select %p35, %s37, %s28
      %p39 = scmp.ge.s32.totalorder %s38, 2
      %s40 = scalar_select %p39, 0, %s38
      %s41 = ssub.s32 %s28, %s40
      %s42 = ssub.s32 %s29, %s36
      %s43 = sor.u32 %s41, %s42
      %p44 = scmp.eq.s32.totalorder %s43, 0
      %s46 = sadd.s32 %s45, 1
      %s47 = scalar_select %p44, %s45, %s46
      %p50 = pneg %p44
      %p51 = scmp.eq.s32.totalorder %s21, 1
      %p52 = por %p50, %p51
      %p53 = scmp.ne.s32.totalorder %s45, %s48
      %p54 = scmp.eq.s32.totalorder %s21, 0
      %p55 = por %p53, %p54
      %p56 = scmp.ne.s32.totalorder %s45, %s48
      %p57 = scmp.eq.s32.totalorder %s26, 1
      %p58 = por %p56, %p57
      %p59 = scmp.ne.s32.totalorder %s48, %s49
      %p60 = scmp.eq.s32.totalorder %s26, 0
      %p61 = por %p59, %p60
      %p62 = scmp.ne.s32.totalorder %s48, %s49
      %p63 = scmp.eq.s32.totalorder %s27, 1
      %p64 = por %p62, %p63
      %p66 = scmp.ne.s32.totalorder %s49, %s65
      %p67 = scmp.eq.s32.totalorder %s27, 0
      %p68 = por %p66, %p67
      %s70 = sadd.s32 %s69, 1
      %p73 = scmp.eq.s32.totalorder %s21, 1
      %p74 = scmp.ne.s32.totalorder %s69, %s71
      %p75 = scmp.eq.s32.totalorder %s21, 0
      %p76 = por %p74, %p75
      %p77 = scmp.ne.s32.totalorder %s69, %s71
      %p78 = scmp.eq.s32.totalorder %s26, 1
      %p79 = por %p77, %p78
      %p80 = scmp.ne.s32.totalorder %s71, %s72
      %p81 = scmp.eq.s32.totalorder %s26, 0
      %p82 = por %p80, %p81
      %p83 = scmp.ne.s32.totalorder %s71, %s72
      %p84 = scmp.eq.s32.totalorder %s27, 1
      %p85 = por %p83, %p84
      %p87 = scmp.ne.s32.totalorder %s72, %s86
      %p88 = scmp.eq.s32.totalorder %s27, 0
      %p89 = por %p87, %p88
      %s91 = sadd.s32 %s90, 1
      %p94 = scmp.eq.s32.totalorder %s21, 1
      %p95 = scmp.ne.s32.totalorder %s90, %s92
      %p96 = scmp.eq.s32.totalorder %s21, 0
      %p97 = por %p95, %p96
      %p98 = scmp.ne.s32.totalorder %s90, %s92
      %p99 = scmp.eq.s32.totalorder %s26, 1
      %p100 = por %p98, %p99
      %p101 = scmp.ne.s32.totalorder %s92, %s93
      %p102 = scmp.eq.s32.totalorder %s26, 0
      %p103 = por %p101, %p102
      %p104 = scmp.ne.s32.totalorder %s92, %s93
      %p105 = scmp.eq.s32.totalorder %s27, 1
      %p106 = por %p104, %p105
      %p108 = scmp.ne.s32.totalorder %s93, %s107
      %p109 = scmp.eq.s32.totalorder %s27, 0
      %p110 = por %p108, %p109
      %s112 = sadd.s32 %s111, 1
      %p115 = scmp.eq.s32.totalorder %s21, 1
      %p116 = scmp.ne.s32.totalorder %s111, %s113
      %p117 = scmp.eq.s32.totalorder %s21, 0
      %p118 = por %p116, %p117
      %p119 = scmp.ne.s32.totalorder %s111, %s113
      %p120 = scmp.eq.s32.totalorder %s26, 1
      %p121 = por %p119, %p120
      %p122 = scmp.ne.s32.totalorder %s113, %s114
      %p123 = scmp.eq.s32.totalorder %s26, 0
      %p124 = por %p122, %p123
      %p125 = scmp.ne.s32.totalorder %s113, %s114
      %p126 = scmp.eq.s32.totalorder %s27, 1
      %p127 = por %p125, %p126
      %p129 = scmp.ne.s32.totalorder %s114, %s128
      %p130 = scmp.eq.s32.totalorder %s27, 0
      %p131 = por %p129, %p130
      %s133 = sadd.s32 %s132, 1
      %p136 = scmp.eq.s32.totalorder %s21, 1
      %p137 = scmp.ne.s32.totalorder %s132, %s134
      %p138 = scmp.eq.s32.totalorder %s21, 0
      %p139 = por %p137, %p138
      %p140 = scmp.ne.s32.totalorder %s132, %s134
      %p141 = scmp.eq.s32.totalorder %s26, 1
      %p142 = por %p140, %p141
      %p143 = scmp.ne.s32.totalorder %s134, %s135
      %p144 = scmp.eq.s32.totalorder %s26, 0
      %p145 = por %p143, %p144
      %p146 = scmp.ne.s32.totalorder %s134, %s135
      %p147 = scmp.eq.s32.totalorder %s27, 1
      %p148 = por %p146, %p147
      %p150 = scmp.ne.s32.totalorder %s135, %s149
      %p151 = scmp.eq.s32.totalorder %s27, 0
      %p152 = por %p150, %p151
      %s154 = sadd.s32 %s153, 1
      %p157 = scmp.eq.s32.totalorder %s21, 1
      %p158 = scmp.ne.s32.totalorder %s153, %s155
      %p159 = scmp.eq.s32.totalorder %s21, 0
      %p160 = por %p158, %p159
      %p161 = scmp.ne.s32.totalorder %s153, %s155
      %p162 = scmp.eq.s32.totalorder %s26, 1
      %p163 = por %p161, %p162
      %p164 = scmp.ne.s32.totalorder %s155, %s156
      %p165 = scmp.eq.s32.totalorder %s26, 0
      %p166 = por %p164, %p165
      %p167 = scmp.ne.s32.totalorder %s155, %s156
      %p168 = scmp.eq.s32.totalorder %s27, 1
      %p169 = por %p167, %p168
      %p171 = scmp.ne.s32.totalorder %s156, %s170
      %p172 = scmp.eq.s32.totalorder %s27, 0
      %p173 = por %p171, %p172
      %s175 = sadd.s32 %s174, 1
      %p178 = scmp.eq.s32.totalorder %s21, 1
      %p179 = scmp.ne.s32.totalorder %s174, %s176
      %p180 = scmp.eq.s32.totalorder %s21, 0
      %p181 = por %p179, %p180
      %p182 = scmp.ne.s32.totalorder %s174, %s176
      %p183 = scmp.eq.s32.totalorder %s26, 1
      %p184 = por %p182, %p183
      %p185 = scmp.ne.s32.totalorder %s176, %s177
      %p186 = scmp.eq.s32.totalorder %s26, 0
      %p187 = por %p185, %p186
      %p188 = scmp.ne.s32.totalorder %s176, %s177
      %p189 = scmp.eq.s32.totalorder %s27, 1
      %p190 = por %p188, %p189
      %p192 = scmp.ne.s32.totalorder %s177, %s191
      %p193 = scmp.eq.s32.totalorder %s27, 0
      %p194 = por %p192, %p193
      %s195 = ssub.s32 %s28, %s40
      %p196 = scmp.eq.s32.totalorder %s195, 0
      %s198 = sadd.s32 %s197, 1
      %s199 = scalar_select %p196, %s197, %s198
      %p202 = pneg %p196
      %p203 = scmp.eq.s32.totalorder %s21, 1
      %p204 = por %p202, %p203
      %p205 = scmp.ne.s32.totalorder %s197, %s200
      %p206 = scmp.eq.s32.totalorder %s21, 0
      %p207 = por %p205, %p206
      %p208 = scmp.ne.s32.totalorder %s197, %s200
      %p209 = scmp.eq.s32.totalorder %s26, 1
      %p210 = por %p208, %p209
      %p211 = scmp.ne.s32.totalorder %s200, %s201
      %p212 = scmp.eq.s32.totalorder %s26, 0
      %p213 = por %p211, %p212
      %p214 = scmp.ne.s32.totalorder %s200, %s201
      %p215 = scmp.eq.s32.totalorder %s27, 1
      %p216 = por %p214, %p215
      %p218 = scmp.ne.s32.totalorder %s201, %s217
      %p219 = scmp.eq.s32.totalorder %s27, 0
      %p220 = por %p218, %p219
      %p221 = scmp.le.s32.totalorder 1, %s21
      %p222 = scmp.lt.s32.totalorder %s21, 3
      %p223 = pnand %p221, %p222
      %p224 = pneg %p223
      // Predicated region
      $region9: #{tpu_custom_call.1} parent=5 // pred_check
        _
      $region10: #{tpu_custom_call.1} parent=5 // pred_check_branch
        %226 = sbr.rel (%p223) target = $region12
      $region11: #{tpu_custom_call.1} parent=5 // pred_region
        %s227 = ssub.s32 %s21, 1
        // Predicated region
        $region13: #{tpu_custom_call.1} parent=11 // pred_check
          %p228 = pneg %p82
        $region14: #{tpu_custom_call.1} parent=11 // pred_check_branch
          %230 = sbr.rel (%p228) target = $region16
        $region15: #{tpu_custom_call.1} parent=11 // pred_region
          %232 = vsyncadd [#allocation8], 0
          %s233 = sshll.u32 %s1, 4
          %s234 = int_to_ptr.hbm [resolvable:$true] %s233
          %s235 = sshll.u32 [#allocation7], 4
          %s236 = int_to_ptr.vmem [resolvable:$true] %s235
          %241 = dma.hbm_to_vmem [thread:$0]  %s234, 16384, %s236, [#allocation8], 256, 256, 16
        $region16: #{tpu_custom_call.1} parent=11 // pred_fallthru
          _
        // Predicated region
        $region17: #{tpu_custom_call.1} parent=11 // pred_check
          %p242 = pneg %p103
        $region18: #{tpu_custom_call.1} parent=11 // pred_check_branch
          %244 = sbr.rel (%p242) target = $region20
        $region19: #{tpu_custom_call.1} parent=11 // pred_region
          _
        $region20: #{tpu_custom_call.1} parent=11 // pred_fallthru
          _
        // Predicated region
        $region21: #{tpu_custom_call.1} parent=11 // pred_check
          %p245 = pneg %p124
        $region22: #{tpu_custom_call.1} parent=11 // pred_check_branch
          %247 = sbr.rel (%p245) target = $region24
        $region23: #{tpu_custom_call.1} parent=11 // pred_region
          %249 = vsyncadd [#allocation8], 0
          %s250 = sshll.u32 %s3, 4
          %s251 = int_to_ptr.hbm [resolvable:$true] %s250
          %s252 = sshll.u32 [#allocation9], 4
          %s253 = int_to_ptr.vmem [resolvable:$true] %s252
          %258 = dma.hbm_to_vmem [thread:$0]  %s251, 4096, %s253, [#allocation8], 128, 128, 8
        $region24: #{tpu_custom_call.1} parent=11 // pred_fallthru
          _
        // Predicated region
        $region25: #{tpu_custom_call.1} parent=11 // pred_check
          %p259 = pneg %p145
        $region26: #{tpu_custom_call.1} parent=11 // pred_check_branch
          %261 = sbr.rel (%p259) target = $region28
        $region27: #{tpu_custom_call.1} parent=11 // pred_region
          _
        $region28: #{tpu_custom_call.1} parent=11 // pred_fallthru
          _
        // Predicated region
        $region29: #{tpu_custom_call.1} parent=11 // pred_check
          %p262 = pneg %p166
        $region30: #{tpu_custom_call.1} parent=11 // pred_check_branch
          %264 = sbr.rel (%p262) target = $region32
        $region31: #{tpu_custom_call.1} parent=11 // pred_region
          _
        $region32: #{tpu_custom_call.1} parent=11 // pred_fallthru
          _
        // Predicated region
        $region33: #{tpu_custom_call.1} parent=11 // pred_check
          %p265 = pneg %p187
        $region34: #{tpu_custom_call.1} parent=11 // pred_check_branch
          %267 = sbr.rel (%p265) target = $region36
        $region35: #{tpu_custom_call.1} parent=11 // pred_region
          _
        $region36: #{tpu_custom_call.1} parent=11 // pred_fallthru
          _
      $region12: #{tpu_custom_call.1} parent=5 // pred_fallthru
        _
      %p268 = scmp.lt.s32.totalorder %s21, 2
      // Predicated region
      $region37: #{tpu_custom_call.1} parent=5 // pred_check
        %p269 = pneg %p268
      $region38: #{tpu_custom_call.1} parent=5 // pred_check_branch
        %271 = sbr.rel (%p269) target = $region40
      $region39: #{tpu_custom_call.1} parent=5 // pred_region
        // Predicated region
        $region41: #{tpu_custom_call.1} parent=39 // pred_check
          %p272 = pneg %p55
        $region42: #{tpu_custom_call.1} parent=39 // pred_check_branch
          %274 = sbr.rel (%p272) target = $region44
        $region43: #{tpu_custom_call.1} parent=39 // pred_region
          %s275 = sand.u32 %s45, 1
          %s276 = scalar_lea.sflag [#allocation5], %s275
          %s277 = sand.u32 %s45, 1
          %s278 = smul.addr %s277, 32
          %s279 = scalar_lea.vmem [#allocation4], %s278
          %281 = vsyncadd %s276, 0
          %s282 = smul.addr %s29, 4
          %s283 = smul.addr %s28, 4
          %s284 = sadd.s32 %s282, %s283
          %s285 = smul.addr %s284, 8
          %s286 = scalar_lea.hbm %s0, %s285
          %s288 = sshll.u32 %s286, 4
          %s289 = int_to_ptr.hbm [resolvable:$true] %s288
          %s290 = sshll.u32 %s279, 4
          %s291 = int_to_ptr.vmem [resolvable:$true] %s290
          %293 = dma.hbm_to_vmem [thread:$0]  %s289, 512, %s291, %s276
        $region44: #{tpu_custom_call.1} parent=39 // pred_fallthru
          _
      $region40: #{tpu_custom_call.1} parent=5 // pred_fallthru
        _
      %p294 = scmp.le.s32.totalorder 1, %s21
      %p295 = scmp.lt.s32.totalorder %s21, 3
      %p296 = pnand %p294, %p295
      %p297 = pneg %p296
      // Predicated region
      $region45: #{tpu_custom_call.1} parent=5 // pred_check
        _
      $region46: #{tpu_custom_call.1} parent=5 // pred_check_branch
        %299 = sbr.rel (%p296) target = $region48
      $region47: #{tpu_custom_call.1} parent=5 // pred_region
        %s300 = ssub.s32 %s21, 1
        %s301 = sand.u32 %s48, 1
        %s302 = scalar_lea.sflag [#allocation5], %s301
        %s303 = sand.u32 %s48, 1
        %s304 = smul.addr %s303, 32
        %s305 = scalar_lea.vmem [#allocation4], %s304
        // Predicated region
        $region49: #{tpu_custom_call.1} parent=47 // pred_check
          %p306 = pneg %p61
        $region50: #{tpu_custom_call.1} parent=47 // pred_check_branch
          %308 = sbr.rel (%p306) target = $region52
        $region51: #{tpu_custom_call.1} parent=47 // pred_region
          %310 = dma.done %s302, 512
        $region52: #{tpu_custom_call.1} parent=47 // pred_fallthru
          _
        // Predicated region
        $region53: #{tpu_custom_call.1} parent=47 // pred_check
          %p311 = pneg %p82
        $region54: #{tpu_custom_call.1} parent=47 // pred_check_branch
          %313 = sbr.rel (%p311) target = $region56
        $region55: #{tpu_custom_call.1} parent=47 // pred_region
          %315 = dma.done [#allocation8], 16384
        $region56: #{tpu_custom_call.1} parent=47 // pred_fallthru
          _
        // Predicated region
        $region57: #{tpu_custom_call.1} parent=47 // pred_check
          %p316 = pneg %p124
        $region58: #{tpu_custom_call.1} parent=47 // pred_check_branch
          %318 = sbr.rel (%p316) target = $region60
        $region59: #{tpu_custom_call.1} parent=47 // pred_region
          %320 = dma.done [#allocation8], 4096
        $region60: #{tpu_custom_call.1} parent=47 // pred_fallthru
          _
        %s321 = sand.u32 %s48, 1
        %s322 = scalar_lea.sflag [#allocation5], %s321
        %s323 = sand.u32 %s48, 1
        %s324 = smul.addr %s323, 32
        %s325 = scalar_lea.vmem [#allocation4], %s324
        %p326 = pneg %p61
        %p327 = pneg %p58
        %p328 = pneg %p82
        %p329 = pneg %p79
        %p330 = pneg %p103
        %p331 = pneg %p100
        %p332 = pneg %p124
        %p333 = pneg %p121
        %p334 = pneg %p145
        %p335 = pneg %p142
        %p336 = pneg %p166
        %p337 = pneg %p163
        %p338 = pneg %p187
        %p339 = pneg %p184
        %p340 = pneg %p213
        %p341 = pneg %p210
        %s342 = sand.u32 %s200, 1
        %s343 = scalar_lea.sflag [#allocation6], %s342
        %s344 = sand.u32 %s200, 1
        %s345 = scalar_lea.vmem [#allocation10], %s344
        %p346 = scmp.eq.s32.totalorder %s31, 0
        // Predicated region
        $region61: #{tpu_custom_call.1} parent=47 // pred_check
          %p347 = pneg %p346
        $region62: #{tpu_custom_call.1} parent=47 // pred_check_branch
          %349 = sbr.rel (%p347) target = $region64
        $region63: #{tpu_custom_call.1} parent=47 // pred_region
          %350 = vst [vmem:[#allocation2] sm:$0x1] 0.0
        $region64: #{tpu_custom_call.1} parent=47 // pred_fallthru
          _
        %v351 = vld [vmem:[%s305] sm:$0xff]
        %v352 = vld [vmem:[%s305 + $0x8] sm:$0xff]
        %v353 = vld [vmem:[%s305 + $0x10] sm:$0xff]
        %v354 = vld [vmem:[%s305 + $0x18] sm:$0xff]
        %v355 = vld [vmem:[#allocation7] sm:$0xff]
        %v356 = vld [vmem:[#allocation7 + $0x8] sm:$0xff]
        %v357 = vld [vmem:[#allocation7 + $0x10] sm:$0xff]
        %v358 = vld [vmem:[#allocation7 + $0x18] sm:$0xff]
        %v359 = vld [vmem:[#allocation7 + $0x20] sm:$0xff]
        %v360 = vld [vmem:[#allocation7 + $0x28] sm:$0xff]
        %v361 = vld [vmem:[#allocation7 + $0x30] sm:$0xff]
        %v362 = vld [vmem:[#allocation7 + $0x38] sm:$0xff]
        %v363 = vld [vmem:[#allocation7 + $0x40] sm:$0xff]
        %v364 = vld [vmem:[#allocation7 + $0x48] sm:$0xff]
        %v365 = vld [vmem:[#allocation7 + $0x50] sm:$0xff]
        %v366 = vld [vmem:[#allocation7 + $0x58] sm:$0xff]
        %v367 = vld [vmem:[#allocation7 + $0x60] sm:$0xff]
        %v368 = vld [vmem:[#allocation7 + $0x68] sm:$0xff]
        %v369 = vld [vmem:[#allocation7 + $0x70] sm:$0xff]
        %v370 = vld [vmem:[#allocation7 + $0x78] sm:$0xff]
        %v371 = vld [vmem:[#allocation7 + $0x80] sm:$0xff]
        %v372 = vld [vmem:[#allocation7 + $0x88] sm:$0xff]
        %v373 = vld [vmem:[#allocation7 + $0x90] sm:$0xff]
        %v374 = vld [vmem:[#allocation7 + $0x98] sm:$0xff]
        %v375 = vld [vmem:[#allocation7 + $0xa0] sm:$0xff]
        %v376 = vld [vmem:[#allocation7 + $0xa8] sm:$0xff]
        %v377 = vld [vmem:[#allocation7 + $0xb0] sm:$0xff]
        %v378 = vld [vmem:[#allocation7 + $0xb8] sm:$0xff]
        %v379 = vld [vmem:[#allocation7 + $0xc0] sm:$0xff]
        %v380 = vld [vmem:[#allocation7 + $0xc8] sm:$0xff]
        %v381 = vld [vmem:[#allocation7 + $0xd0] sm:$0xff]
        %v382 = vld [vmem:[#allocation7 + $0xd8] sm:$0xff]
        %v383 = vld [vmem:[#allocation7 + $0xe0] sm:$0xff]
        %v384 = vld [vmem:[#allocation7 + $0xe8] sm:$0xff]
        %v385 = vld [vmem:[#allocation7 + $0xf0] sm:$0xff]
        %v386 = vld [vmem:[#allocation7 + $0xf8] sm:$0xff]
        %v387 = vld [vmem:[#allocation7 + $0x100] sm:$0xff]
        %v388 = vld [vmem:[#allocation7 + $0x108] sm:$0xff]
        %v389 = vld [vmem:[#allocation7 + $0x110] sm:$0xff]
        %v390 = vld [vmem:[#allocation7 + $0x118] sm:$0xff]
        %v391 = vld [vmem:[#allocation7 + $0x120] sm:$0xff]
        %v392 = vld [vmem:[#allocation7 + $0x128] sm:$0xff]
        %v393 = vld [vmem:[#allocation7 + $0x130] sm:$0xff]
        %v394 = vld [vmem:[#allocation7 + $0x138] sm:$0xff]
        %v395 = vld [vmem:[#allocation7 + $0x140] sm:$0xff]
        %v396 = vld [vmem:[#allocation7 + $0x148] sm:$0xff]
        %v397 = vld [vmem:[#allocation7 + $0x150] sm:$0xff]
        %v398 = vld [vmem:[#allocation7 + $0x158] sm:$0xff]
        %v399 = vld [vmem:[#allocation7 + $0x160] sm:$0xff]
        %v400 = vld [vmem:[#allocation7 + $0x168] sm:$0xff]
        %v401 = vld [vmem:[#allocation7 + $0x170] sm:$0xff]
        %v402 = vld [vmem:[#allocation7 + $0x178] sm:$0xff]
        %v403 = vld [vmem:[#allocation7 + $0x180] sm:$0xff]
        %v404 = vld [vmem:[#allocation7 + $0x188] sm:$0xff]
        %v405 = vld [vmem:[#allocation7 + $0x190] sm:$0xff]
        %v406 = vld [vmem:[#allocation7 + $0x198] sm:$0xff]
        %v407 = vld [vmem:[#allocation7 + $0x1a0] sm:$0xff]
        %v408 = vld [vmem:[#allocation7 + $0x1a8] sm:$0xff]
        %v409 = vld [vmem:[#allocation7 + $0x1b0] sm:$0xff]
        %v410 = vld [vmem:[#allocation7 + $0x1b8] sm:$0xff]
        %v411 = vld [vmem:[#allocation7 + $0x1c0] sm:$0xff]
        %v412 = vld [vmem:[#allocation7 + $0x1c8] sm:$0xff]
        %v413 = vld [vmem:[#allocation7 + $0x1d0] sm:$0xff]
        %v414 = vld [vmem:[#allocation7 + $0x1d8] sm:$0xff]
        %v415 = vld [vmem:[#allocation7 + $0x1e0] sm:$0xff]
        %v416 = vld [vmem:[#allocation7 + $0x1e8] sm:$0xff]
        %v417 = vld [vmem:[#allocation7 + $0x1f0] sm:$0xff]
        %v418 = vld [vmem:[#allocation7 + $0x1f8] sm:$0xff]
        %v419 = vld [vmem:[#allocation7 + $0x200] sm:$0xff]
        %v420 = vld [vmem:[#allocation7 + $0x208] sm:$0xff]
        %v421 = vld [vmem:[#allocation7 + $0x210] sm:$0xff]
        %v422 = vld [vmem:[#allocation7 + $0x218] sm:$0xff]
        %v423 = vld [vmem:[#allocation7 + $0x220] sm:$0xff]
        %v424 = vld [vmem:[#allocation7 + $0x228] sm:$0xff]
        %v425 = vld [vmem:[#allocation7 + $0x230] sm:$0xff]
        %v426 = vld [vmem:[#allocation7 + $0x238] sm:$0xff]
        %v427 = vld [vmem:[#allocation7 + $0x240] sm:$0xff]
        %v428 = vld [vmem:[#allocation7 + $0x248] sm:$0xff]
        %v429 = vld [vmem:[#allocation7 + $0x250] sm:$0xff]
        %v430 = vld [vmem:[#allocation7 + $0x258] sm:$0xff]
        %v431 = vld [vmem:[#allocation7 + $0x260] sm:$0xff]
        %v432 = vld [vmem:[#allocation7 + $0x268] sm:$0xff]
        %v433 = vld [vmem:[#allocation7 + $0x270] sm:$0xff]
        %v434 = vld [vmem:[#allocation7 + $0x278] sm:$0xff]
        %v435 = vld [vmem:[#allocation7 + $0x280] sm:$0xff]
        %v436 = vld [vmem:[#allocation7 + $0x288] sm:$0xff]
        %v437 = vld [vmem:[#allocation7 + $0x290] sm:$0xff]
        %v438 = vld [vmem:[#allocation7 + $0x298] sm:$0xff]
        %v439 = vld [vmem:[#allocation7 + $0x2a0] sm:$0xff]
        %v440 = vld [vmem:[#allocation7 + $0x2a8] sm:$0xff]
        %v441 = vld [vmem:[#allocation7 + $0x2b0] sm:$0xff]
        %v442 = vld [vmem:[#allocation7 + $0x2b8] sm:$0xff]
        %v443 = vld [vmem:[#allocation7 + $0x2c0] sm:$0xff]
        %v444 = vld [vmem:[#allocation7 + $0x2c8] sm:$0xff]
        %v445 = vld [vmem:[#allocation7 + $0x2d0] sm:$0xff]
        %v446 = vld [vmem:[#allocation7 + $0x2d8] sm:$0xff]
        %v447 = vld [vmem:[#allocation7 + $0x2e0] sm:$0xff]
        %v448 = vld [vmem:[#allocation7 + $0x2e8] sm:$0xff]
        %v449 = vld [vmem:[#allocation7 + $0x2f0] sm:$0xff]
        %v450 = vld [vmem:[#allocation7 + $0x2f8] sm:$0xff]
        %v451 = vld [vmem:[#allocation7 + $0x300] sm:$0xff]
        %v452 = vld [vmem:[#allocation7 + $0x308] sm:$0xff]
        %v453 = vld [vmem:[#allocation7 + $0x310] sm:$0xff]
        %v454 = vld [vmem:[#allocation7 + $0x318] sm:$0xff]
        %v455 = vld [vmem:[#allocation7 + $0x320] sm:$0xff]
        %v456 = vld [vmem:[#allocation7 + $0x328] sm:$0xff]
        %v457 = vld [vmem:[#allocation7 + $0x330] sm:$0xff]
        %v458 = vld [vmem:[#allocation7 + $0x338] sm:$0xff]
        %v459 = vld [vmem:[#allocation7 + $0x340] sm:$0xff]
        %v460 = vld [vmem:[#allocation7 + $0x348] sm:$0xff]
        %v461 = vld [vmem:[#allocation7 + $0x350] sm:$0xff]
        %v462 = vld [vmem:[#allocation7 + $0x358] sm:$0xff]
        %v463 = vld [vmem:[#allocation7 + $0x360] sm:$0xff]
        %v464 = vld [vmem:[#allocation7 + $0x368] sm:$0xff]
        %v465 = vld [vmem:[#allocation7 + $0x370] sm:$0xff]
        %v466 = vld [vmem:[#allocation7 + $0x378] sm:$0xff]
        %v467 = vld [vmem:[#allocation7 + $0x380] sm:$0xff]
        %v468 = vld [vmem:[#allocation7 + $0x388] sm:$0xff]
        %v469 = vld [vmem:[#allocation7 + $0x390] sm:$0xff]
        %v470 = vld [vmem:[#allocation7 + $0x398] sm:$0xff]
        %v471 = vld [vmem:[#allocation7 + $0x3a0] sm:$0xff]
        %v472 = vld [vmem:[#allocation7 + $0x3a8] sm:$0xff]
        %v473 = vld [vmem:[#allocation7 + $0x3b0] sm:$0xff]
        %v474 = vld [vmem:[#allocation7 + $0x3b8] sm:$0xff]
        %v475 = vld [vmem:[#allocation7 + $0x3c0] sm:$0xff]
        %v476 = vld [vmem:[#allocation7 + $0x3c8] sm:$0xff]
        %v477 = vld [vmem:[#allocation7 + $0x3d0] sm:$0xff]
        %v478 = vld [vmem:[#allocation7 + $0x3d8] sm:$0xff]
        %v479 = vld [vmem:[#allocation7 + $0x3e0] sm:$0xff]
        %v480 = vld [vmem:[#allocation7 + $0x3e8] sm:$0xff]
        %v481 = vld [vmem:[#allocation7 + $0x3f0] sm:$0xff]
        %v482 = vld [vmem:[#allocation7 + $0x3f8] sm:$0xff]
        %v483 = vld [vmem:[%s2] sm:$0x3]
        %v485 = vperm.slane %v483, 0
        %v486 = vperm.slane %v483, 1
        %489 = vmatpush.msra.mxu0 %v385
        %490 = vmatpush.msra.mxu0 %v383
        %491 = vmatpush.msra.mxu0 %v381
        %492 = vmatpush.msra.mxu0 %v379
        %493 = vmatpush.msra.mxu0 %v377
        %494 = vmatpush.msra.mxu0 %v375
        %495 = vmatpush.msra.mxu0 %v373
        %496 = vmatpush.msra.mxu0 %v371
        %497 = vmatpush.msra.mxu0 %v369
        %498 = vmatpush.msra.mxu0 %v367
        %499 = vmatpush.msra.mxu0 %v365
        %500 = vmatpush.msra.mxu0 %v363
        %501 = vmatpush.msra.mxu0 %v361
        %502 = vmatpush.msra.mxu0 %v359
        %503 = vmatpush.msra.mxu0 %v357
        %504 = vmatpush.msra.mxu0 %v355
        %505 = vmatmul.f32.gmra.mxu0 %v351
        %v506 = vpop.f32.mrf.mxu0
        %v507 = vadd.f32 %v485, %v506
        %508 = vdwg.mxu0
        %509 = vmatpush.msra.mxu0 %v417
        %510 = vmatpush.msra.mxu0 %v415
        %511 = vmatpush.msra.mxu0 %v413
        %512 = vmatpush.msra.mxu0 %v411
        %513 = vmatpush.msra.mxu0 %v409
        %514 = vmatpush.msra.mxu0 %v407
        %515 = vmatpush.msra.mxu0 %v405
        %516 = vmatpush.msra.mxu0 %v403
        %517 = vmatpush.msra.mxu0 %v401
        %518 = vmatpush.msra.mxu0 %v399
        %519 = vmatpush.msra.mxu0 %v397
        %520 = vmatpush.msra.mxu0 %v395
        %521 = vmatpush.msra.mxu0 %v393
        %522 = vmatpush.msra.mxu0 %v391
        %523 = vmatpush.msra.mxu0 %v389
        %524 = vmatpush.msra.mxu0 %v387
        %525 = vmatmul.f32.gmra.mxu0 %v352
        %v526 = vpop.f32.mrf.mxu0
        %v527 = vadd.f32 %v507, %v526
        %528 = vdwg.mxu0
        %529 = vmatpush.msra.mxu0 %v449
        %530 = vmatpush.msra.mxu0 %v447
        %531 = vmatpush.msra.mxu0 %v445
        %532 = vmatpush.msra.mxu0 %v443
        %533 = vmatpush.msra.mxu0 %v441
        %534 = vmatpush.msra.mxu0 %v439
        %535 = vmatpush.msra.mxu0 %v437
        %536 = vmatpush.msra.mxu0 %v435
        %537 = vmatpush.msra.mxu0 %v433
        %538 = vmatpush.msra.mxu0 %v431
        %539 = vmatpush.msra.mxu0 %v429
        %540 = vmatpush.msra.mxu0 %v427
        %541 = vmatpush.msra.mxu0 %v425
        %542 = vmatpush.msra.mxu0 %v423
        %543 = vmatpush.msra.mxu0 %v421
        %544 = vmatpush.msra.mxu0 %v419
        %545 = vmatmul.f32.gmra.mxu0 %v353
        %v546 = vpop.f32.mrf.mxu0
        %v547 = vadd.f32 %v527, %v546
        %548 = vdwg.mxu0
        %549 = vmatpush.msra.mxu0 %v481
        %550 = vmatpush.msra.mxu0 %v479
        %551 = vmatpush.msra.mxu0 %v477
        %552 = vmatpush.msra.mxu0 %v475
        %553 = vmatpush.msra.mxu0 %v473
        %554 = vmatpush.msra.mxu0 %v471
        %555 = vmatpush.msra.mxu0 %v469
        %556 = vmatpush.msra.mxu0 %v467
        %557 = vmatpush.msra.mxu0 %v465
        %558 = vmatpush.msra.mxu0 %v463
        %559 = vmatpush.msra.mxu0 %v461
        %560 = vmatpush.msra.mxu0 %v459
        %561 = vmatpush.msra.mxu0 %v457
        %562 = vmatpush.msra.mxu0 %v455
        %563 = vmatpush.msra.mxu0 %v453
        %564 = vmatpush.msra.mxu0 %v451
        %565 = vmatmul.f32.gmra.mxu0 %v354
        %v566 = vpop.f32.mrf.mxu0
        %v567 = vadd.f32 %v547, %v566
        %568 = vdwg.mxu0
        %569 = vmatpush.msra.mxu0 %v386
        %570 = vmatpush.msra.mxu0 %v384
        %571 = vmatpush.msra.mxu0 %v382
        %572 = vmatpush.msra.mxu0 %v380
        %573 = vmatpush.msra.mxu0 %v378
        %574 = vmatpush.msra.mxu0 %v376
        %575 = vmatpush.msra.mxu0 %v374
        %576 = vmatpush.msra.mxu0 %v372
        %577 = vmatpush.msra.mxu0 %v370
        %578 = vmatpush.msra.mxu0 %v368
        %579 = vmatpush.msra.mxu0 %v366
        %580 = vmatpush.msra.mxu0 %v364
        %581 = vmatpush.msra.mxu0 %v362
        %582 = vmatpush.msra.mxu0 %v360
        %583 = vmatpush.msra.mxu0 %v358
        %584 = vmatpush.msra.mxu0 %v356
        %585 = vmatmul.f32.gmra.mxu0 %v351
        %v586 = vpop.f32.mrf.mxu0
        %v587 = vadd.f32 %v486, %v586
        %588 = vdwg.mxu0
        %589 = vmatpush.msra.mxu0 %v418
        %590 = vmatpush.msra.mxu0 %v416
        %591 = vmatpush.msra.mxu0 %v414
        %592 = vmatpush.msra.mxu0 %v412
        %593 = vmatpush.msra.mxu0 %v410
        %594 = vmatpush.msra.mxu0 %v408
        %595 = vmatpush.msra.mxu0 %v406
        %596 = vmatpush.msra.mxu0 %v404
        %597 = vmatpush.msra.mxu0 %v402
        %598 = vmatpush.msra.mxu0 %v400
        %599 = vmatpush.msra.mxu0 %v398
        %600 = vmatpush.msra.mxu0 %v396
        %601 = vmatpush.msra.mxu0 %v394
        %602 = vmatpush.msra.mxu0 %v392
        %603 = vmatpush.msra.mxu0 %v390
        %604 = vmatpush.msra.mxu0 %v388
        %605 = vmatmul.f32.gmra.mxu0 %v352
        %v606 = vpop.f32.mrf.mxu0
        %v607 = vadd.f32 %v587, %v606
        %608 = vdwg.mxu0
        %609 = vmatpush.msra.mxu0 %v450
        %610 = vmatpush.msra.mxu0 %v448
        %611 = vmatpush.msra.mxu0 %v446
        %612 = vmatpush.msra.mxu0 %v444
        %613 = vmatpush.msra.mxu0 %v442
        %614 = vmatpush.msra.mxu0 %v440
        %615 = vmatpush.msra.mxu0 %v438
        %616 = vmatpush.msra.mxu0 %v436
        %617 = vmatpush.msra.mxu0 %v434
        %618 = vmatpush.msra.mxu0 %v432
        %619 = vmatpush.msra.mxu0 %v430
        %620 = vmatpush.msra.mxu0 %v428
        %621 = vmatpush.msra.mxu0 %v426
        %622 = vmatpush.msra.mxu0 %v424
        %623 = vmatpush.msra.mxu0 %v422
        %624 = vmatpush.msra.mxu0 %v420
        %625 = vmatmul.f32.gmra.mxu0 %v353
        %v626 = vpop.f32.mrf.mxu0
        %v627 = vadd.f32 %v607, %v626
        %628 = vdwg.mxu0
        %629 = vmatpush.msra.mxu0 %v482
        %630 = vmatpush.msra.mxu0 %v480
        %631 = vmatpush.msra.mxu0 %v478
        %632 = vmatpush.msra.mxu0 %v476
        %633 = vmatpush.msra.mxu0 %v474
        %634 = vmatpush.msra.mxu0 %v472
        %635 = vmatpush.msra.mxu0 %v470
        %636 = vmatpush.msra.mxu0 %v468
        %637 = vmatpush.msra.mxu0 %v466
        %638 = vmatpush.msra.mxu0 %v464
        %639 = vmatpush.msra.mxu0 %v462
        %640 = vmatpush.msra.mxu0 %v460
        %641 = vmatpush.msra.mxu0 %v458
        %642 = vmatpush.msra.mxu0 %v456
        %643 = vmatpush.msra.mxu0 %v454
        %644 = vmatpush.msra.mxu0 %v452
        %645 = vmatmul.f32.gmra.mxu0 %v354
        %v646 = vpop.f32.mrf.mxu0
        %v647 = vadd.f32 %v627, %v646
        %648 = vdwg.mxu0
        %v649 = vmax.f32 %v567, 0.0
        %v650 = vmax.f32 %v647, 0.0
        %v651 = vld [vmem:[#allocation9] sm:$0xff]
        %v652 = vld [vmem:[#allocation9 + $0x8] sm:$0xff]
        %v653 = vld [vmem:[#allocation9 + $0x10] sm:$0xff]
        %v654 = vld [vmem:[#allocation9 + $0x18] sm:$0xff]
        %v655 = vld [vmem:[#allocation9 + $0x20] sm:$0xff]
        %v656 = vld [vmem:[#allocation9 + $0x28] sm:$0xff]
        %v657 = vld [vmem:[#allocation9 + $0x30] sm:$0xff]
        %v658 = vld [vmem:[#allocation9 + $0x38] sm:$0xff]
        %v659 = vld [vmem:[#allocation9 + $0x40] sm:$0xff]
        %v660 = vld [vmem:[#allocation9 + $0x48] sm:$0xff]
        %v661 = vld [vmem:[#allocation9 + $0x50] sm:$0xff]
        %v662 = vld [vmem:[#allocation9 + $0x58] sm:$0xff]
        %v663 = vld [vmem:[#allocation9 + $0x60] sm:$0xff]
        %v664 = vld [vmem:[#allocation9 + $0x68] sm:$0xff]
        %v665 = vld [vmem:[#allocation9 + $0x70] sm:$0xff]
        %v666 = vld [vmem:[#allocation9 + $0x78] sm:$0xff]
        %v667 = vld [vmem:[#allocation9 + $0x80] sm:$0xff]
        %v668 = vld [vmem:[#allocation9 + $0x88] sm:$0xff]
        %v669 = vld [vmem:[#allocation9 + $0x90] sm:$0xff]
        %v670 = vld [vmem:[#allocation9 + $0x98] sm:$0xff]
        %v671 = vld [vmem:[#allocation9 + $0xa0] sm:$0xff]
        %v672 = vld [vmem:[#allocation9 + $0xa8] sm:$0xff]
        %v673 = vld [vmem:[#allocation9 + $0xb0] sm:$0xff]
        %v674 = vld [vmem:[#allocation9 + $0xb8] sm:$0xff]
        %v675 = vld [vmem:[#allocation9 + $0xc0] sm:$0xff]
        %v676 = vld [vmem:[#allocation9 + $0xc8] sm:$0xff]
        %v677 = vld [vmem:[#allocation9 + $0xd0] sm:$0xff]
        %v678 = vld [vmem:[#allocation9 + $0xd8] sm:$0xff]
        %v679 = vld [vmem:[#allocation9 + $0xe0] sm:$0xff]
        %v680 = vld [vmem:[#allocation9 + $0xe8] sm:$0xff]
        %v681 = vld [vmem:[#allocation9 + $0xf0] sm:$0xff]
        %v682 = vld [vmem:[#allocation9 + $0xf8] sm:$0xff]
        %v683 = vld [vmem:[%s4] sm:$0x1]
        %v685 = vperm.slane %v683, 0
        %687 = vmatpush.msra.mxu0 %v666
        %688 = vmatpush.msra.mxu0 %v665
        %689 = vmatpush.msra.mxu0 %v664
        %690 = vmatpush.msra.mxu0 %v663
        %691 = vmatpush.msra.mxu0 %v662
        %692 = vmatpush.msra.mxu0 %v661
        %693 = vmatpush.msra.mxu0 %v660
        %694 = vmatpush.msra.mxu0 %v659
        %695 = vmatpush.msra.mxu0 %v658
        %696 = vmatpush.msra.mxu0 %v657
        %697 = vmatpush.msra.mxu0 %v656
        %698 = vmatpush.msra.mxu0 %v655
        %699 = vmatpush.msra.mxu0 %v654
        %700 = vmatpush.msra.mxu0 %v653
        %701 = vmatpush.msra.mxu0 %v652
        %702 = vmatpush.msra.mxu0 %v651
        %703 = vmatmul.f32.gmra.mxu0 %v649
        %v704 = vpop.f32.mrf.mxu0
        %v705 = vadd.f32 %v685, %v704
        %706 = vdwg.mxu0
        %707 = vmatpush.msra.mxu0 %v682
        %708 = vmatpush.msra.mxu0 %v681
        %709 = vmatpush.msra.mxu0 %v680
        %710 = vmatpush.msra.mxu0 %v679
        %711 = vmatpush.msra.mxu0 %v678
        %712 = vmatpush.msra.mxu0 %v677
        %713 = vmatpush.msra.mxu0 %v676
        %714 = vmatpush.msra.mxu0 %v675
        %715 = vmatpush.msra.mxu0 %v674
        %716 = vmatpush.msra.mxu0 %v673
        %717 = vmatpush.msra.mxu0 %v672
        %718 = vmatpush.msra.mxu0 %v671
        %719 = vmatpush.msra.mxu0 %v670
        %720 = vmatpush.msra.mxu0 %v669
        %721 = vmatpush.msra.mxu0 %v668
        %722 = vmatpush.msra.mxu0 %v667
        %723 = vmatmul.f32.gmra.mxu0 %v650
        %v724 = vpop.f32.mrf.mxu0
        %v725 = vadd.f32 %v705, %v724
        %726 = vdwg.mxu0
        %v727 = vmax.f32 %v725, 0.0
        %v728 = vld [vmem:[#allocation2] sm:$0x1]
        %v729 = vld [vmem:[%s5] sm:$0x1]
        %v731 = vperm.slane %v729, 0
        %v733 = vmul.f32 %v727, %v731
        %v734 = vrot.slane %v733, 4
        %v735 = vadd.f32 %v733, %v734
        %v736 = vrot.slane %v735, 2
        %v737 = vadd.f32 %v735, %v736
        %v738 = vrot.slane %v737, 1
        %v739 = vadd.f32 %v737, %v738
        %v740 = vadd.f32 %v728, %v739
        %741 = vst [vmem:[#allocation2] sm:$0x1] %v740
        // Predicated region
        $region65: #{tpu_custom_call.1} parent=47 // pred_check
          %p742 = pneg %p346
        $region66: #{tpu_custom_call.1} parent=47 // pred_check_branch
          %744 = sbr.rel (%p742) target = $region68
        $region67: #{tpu_custom_call.1} parent=47 // pred_region
          %v745 = vld [vmem:[#allocation2] sm:$0x1]
          %vm746 = vcmask 1040384
          %v747 = vsel %vm746, %v745, 0.0
          %748 = vadd.xlane.f32.xlu0 %v747
          %v749 = vpop.xlane.xlu0 %748
          %v750 = vrot.slane %v749, 4
          %v751 = vadd.f32 %v749, %v750
          %v752 = vrot.slane %v751, 2
          %v753 = vadd.f32 %v751, %v752
          %v754 = vrot.slane %v753, 1
          %v755 = vadd.f32 %v753, %v754
          %s756 = vtos %v755
          %s757 = smul.f32 %s756, 0.125
          %s758 = sld [smem:[#allocation3]]
          %s759 = sadd.f32 %s757, %s758
          %v760 = vstv %s759
          %761 = vst [vmem:[%s345] sm:$0x1] %v760
        $region68: #{tpu_custom_call.1} parent=47 // pred_fallthru
          _
        %s762 = sand.u32 %s200, 1
        %s763 = scalar_lea.sflag [#allocation6], %s762
        %s764 = sand.u32 %s200, 1
        %s765 = scalar_lea.vmem [#allocation10], %s764
        // Predicated region
        $region69: #{tpu_custom_call.1} parent=47 // pred_check
          %p766 = pneg %p210
        $region70: #{tpu_custom_call.1} parent=47 // pred_check_branch
          %768 = sbr.rel (%p766) target = $region72
        $region71: #{tpu_custom_call.1} parent=47 // pred_region
          %770 = vsyncadd %s763, 0
          %s771 = scalar_lea.hbm %s7, %s30
          %s773 = sshll.u32 %s765, 4
          %s774 = int_to_ptr.vmem [resolvable:$true] %s773
          %s775 = sshll.u32 %s771, 4
          %s776 = int_to_ptr.hbm [resolvable:$true] %s775
          %778 = dma.vmem_to_hbm [thread:$0]  %s774, 16, %s776, %s763
        $region72: #{tpu_custom_call.1} parent=47 // pred_fallthru
          _
      $region48: #{tpu_custom_call.1} parent=5 // pred_fallthru
        _
      %p779 = scmp.le.s32.totalorder 2, %s21
      // Predicated region
      $region73: #{tpu_custom_call.1} parent=5 // pred_check
        %p780 = pneg %p779
      $region74: #{tpu_custom_call.1} parent=5 // pred_check_branch
        %782 = sbr.rel (%p780) target = $region76
      $region75: #{tpu_custom_call.1} parent=5 // pred_region
        %s783 = ssub.s32 %s21, 2
        // Predicated region
        $region77: #{tpu_custom_call.1} parent=75 // pred_check
          %p784 = pneg %p216
        $region78: #{tpu_custom_call.1} parent=75 // pred_check_branch
          %786 = sbr.rel (%p784) target = $region80
        $region79: #{tpu_custom_call.1} parent=75 // pred_region
          %s787 = sand.u32 %s201, 1
          %s788 = scalar_lea.sflag [#allocation6], %s787
          %s789 = sand.u32 %s201, 1
          %s790 = scalar_lea.vmem [#allocation10], %s789
          %792 = dma.done %s788, 16
        $region80: #{tpu_custom_call.1} parent=75 // pred_fallthru
          _
      $region76: #{tpu_custom_call.1} parent=5 // pred_fallthru
        _
    $region6: #{tpu_custom_call.1} parent=1 // loop_footer
      %s25 = sadd.s32 1, %s21
    $region7: #{tpu_custom_call.1} parent=1 // loop_footer_branch
      %20 = sbr.rel target = $region3
    $region8: #{tpu_custom_call.1} parent=1 // loop_exit
      _
    %793 = vsyncpa [#allocation5], 1
    %s794 = scalar_lea.sflag [#allocation5], 1
    %795 = vsyncpa %s794, 1
    %796 = vsyncpa [#allocation8], 1
    %797 = vsyncpa [#allocation6], 1
    %s798 = scalar_lea.sflag [#allocation6], 1
    %799 = vsyncpa %s798, 1

</llo_original>
